<compile_context>
chip_gen: v6e
topology: v6e:2x2x1
jax: 0.10.0
libtpu: 0.0.40
codegen_flags: <defaults>
</compile_context>

<pallas_src>
import jax
import jax.numpy as jnp
from jax import lax
from jax.experimental import pallas as pl
from jax.experimental.pallas import tpu as pltpu


def _value_head_kernel(x_ref, w_ref, b_ref, o_ref):
    # x_ref: (tm, H) VMEM   w_ref: (1, H) VMEM (lane-major, resident)
    # b_ref: (1,)   SMEM    o_ref: (1, tm) VMEM (lane-dense)
    acc = lax.dot_general(
        w_ref[...],
        x_ref[...],
        dimension_numbers=(((1,), (1,)), ((), ())),   # contract H with H -> (1, tm)
        preferred_element_type=jnp.float32,
    )
    o_ref[...] = (acc + b_ref[0]).astype(o_ref.dtype)


_VMEM_CAP = None


def _vmem_capacity_bytes():
    """Per-core VMEM capacity (64 MiB on v7x, 128 MiB on v5e/v6e); safe fallback."""
    global _VMEM_CAP
    if _VMEM_CAP is None:
        try:
            _VMEM_CAP = int(pltpu.get_tpu_info().vmem_capacity_bytes)
        except Exception:
            _VMEM_CAP = 64 * 1024 * 1024   # assume the smallest (v7x per-TC)
    return _VMEM_CAP


def _pick_tile_m(M, H, itemsize, vmem_cap):
    """Row tile: multiple of 128, VMEM-budgeted, keeping >= 8 grid steps for big M."""
    # Per-buffer x tile budget: ~vmem/16 => 4 MiB on v7x, 8 MiB on v5e/v6e.
    budget = min(8 << 20, max(1 << 20, vmem_cap // 16))
    if M <= 1024:
        # Few rows: one block covering all rows (block dims == full array dims,
        # so no (8,128) divisibility requirement applies).
        return M
    rows_by_vmem = max(128, (budget // max(1, H * itemsize)) // 128 * 128)
    # Target >= 8 grid steps so v7x's 2 TensorCores get balanced work and the
    # DMA pipeline has depth; per-step overhead (~0.35 us) stays negligible.
    rows_by_steps = max(128, pl.cdiv(pl.cdiv(M, 8), 128) * 128)
    return min(M, rows_by_vmem, rows_by_steps)


def _resident_weight_spec(H):
    # Constant block index => double-buffering the (sublane-padded) weight buys
    # nothing; single-buffer it if this JAX version accepts pipeline_mode.
    try:
        return pl.BlockSpec((1, H), lambda i: (0, 0), pipeline_mode=pl.Buffered(1))
    except TypeError:
        return pl.BlockSpec((1, H), lambda i: (0, 0))


@jax.jit
def value_head_forward(hidden_states, weight, bias):
    """hidden_states: (B, S, H); weight: (1, H) (PyTorch layout); bias: (1,).

    Returns (B, S), matching ValueHead.forward (Linear(H, 1) then squeeze(-1)).
    """
    B, S, H = hidden_states.shape
    M = B * S
    out_dtype = hidden_states.dtype

    x = hidden_states.reshape(M, H)
    w = weight.reshape(1, H)                 # keep lane-major; no (H, 1) column
    b = bias.reshape(1).astype(jnp.float32)  # scalar bias -> SMEM

    itemsize = jnp.dtype(x.dtype).itemsize
    vmem_cap = _vmem_capacity_bytes()
    tm = _pick_tile_m(M, H, itemsize, vmem_cap)
    grid = (pl.cdiv(M, tm),)

    # VMEM accounting: double-buffered x tile + resident sublane-padded weight
    # + double-buffered lane-dense (1, tm) output (sublane-padded to 8) + slack.
    x_bytes = 2 * tm * H * itemsize
    w_bytes = 8 * H * 4
    o_bytes = 2 * 8 * max(tm, 128) * 4
    vmem_limit = x_bytes + w_bytes + o_bytes + (4 << 20)
    vmem_limit = int(min(max(vmem_limit, 16 << 20), max(16 << 20, vmem_cap // 2)))

    out = pl.pallas_call(
        _value_head_kernel,
        out_shape=jax.ShapeDtypeStruct((1, M), out_dtype),
        grid_spec=pltpu.PrefetchScalarGridSpec(
            num_scalar_prefetch=0,
            grid=grid,
            in_specs=[
                pl.BlockSpec((tm, H), lambda i: (i, 0)),            # x row tile (streamed)
                _resident_weight_spec(H),                           # weight, resident
                pl.BlockSpec(memory_space=pltpu.MemorySpace.SMEM),  # bias scalar in SMEM
            ],
            out_specs=pl.BlockSpec((1, tm), lambda i: (0, i)),      # lane-dense output
        ),
        compiler_params=pltpu.CompilerParams(
            dimension_semantics=("parallel",),
            vmem_limit_bytes=vmem_limit,
        ),
    )(x, w, b)

    return out.reshape(B, S)


if __name__ == "__main__":
    key = jax.random.PRNGKey(0)
    k_x, k_w, k_b, k_x2 = jax.random.split(key, 4)

    # 1) Small shapes consistent with the module: batch=2, seq=8, hidden=32.
    B, S, H = 2, 8, 32
    hidden_states = jax.random.normal(k_x, (B, S, H), dtype=jnp.float32)
    # Deterministic Linear(hidden_size, 1) params (PyTorch layout: weight (1, H), bias (1,)).
    weight = jax.random.normal(k_w, (1, H), dtype=jnp.float32) * 0.02
    bias = jax.random.normal(k_b, (1,), dtype=jnp.float32) * 0.02

    out = jax.block_until_ready(value_head_forward(hidden_states, weight, bias))
    ref = (hidden_states @ weight.reshape(H, 1) + bias).squeeze(-1)
    assert out.shape == (B, S), out.shape
    assert jnp.allclose(out, ref, atol=1e-5, rtol=1e-5), "f32 mismatch vs reference"

    # 2) Multi-step grid with a ragged last tile + bf16 input path
    #    (M = 1400 -> tm = 256, 6 grid steps, 120-row masked tail).
    B2, S2, H2 = 2, 700, 256
    x2 = (jax.random.normal(k_x2, (B2, S2, H2), dtype=jnp.float32) * 0.5).astype(jnp.bfloat16)
    w2 = (jax.random.normal(k_w, (1, H2), dtype=jnp.float32) * 0.02).astype(jnp.bfloat16)
    out2 = jax.block_until_ready(value_head_forward(x2, w2, bias))
    ref2 = (x2.astype(jnp.float32) @ w2.astype(jnp.float32).reshape(H2, 1) + bias).squeeze(-1)
    assert out2.shape == (B2, S2), out2.shape
    assert jnp.allclose(out2.astype(jnp.float32), ref2, atol=2e-2, rtol=2e-2), \
        "bf16 mismatch vs reference"

    print("KERNEL_OK")
</pallas_src>

<mosaic_0001>
module attributes {stable_mosaic.version = 11 : i64} {
  func.func @_value_head_kernel(%arg0: i32, %arg1: memref<16x32xf32, #tpu.memory_space<vmem>>, %arg2: memref<1x32xf32, #tpu.memory_space<vmem>>, %arg3: memref<1xf32, #tpu.memory_space<smem>>, %arg4: memref<1x16xf32, #tpu.memory_space<vmem>>) attributes {dimension_semantics = [#tpu.dimension_semantics<parallel>], iteration_bounds = array<i64: 1>, scalar_prefetch = 0 : i64, scratch_operands = 0 : i64, tpu.core_type = #tpu.core_type<tc>, window_params = [{transform_indices = @transform_0, window_bounds = array<i64: 16, 32>}, {pipeline_mode = #tpu.pipeline_mode<synchronous>, transform_indices = @transform_1, window_bounds = array<i64: 1, 32>}, {transform_indices = @transform_2, window_bounds = array<i64: 1>}, {transform_indices = @transform_3, window_bounds = array<i64: 1, 16>}]} {
    %c0 = arith.constant 0 : index
    %c0_0 = arith.constant 0 : index
    %0 = vector.load %arg2[%c0, %c0_0] : memref<1x32xf32, #tpu.memory_space<vmem>>, vector<1x32xf32>
    %c0_1 = arith.constant 0 : index
    %c0_2 = arith.constant 0 : index
    %1 = vector.load %arg1[%c0_1, %c0_2] : memref<16x32xf32, #tpu.memory_space<vmem>>, vector<16x32xf32>
    %cst = arith.constant dense<0.000000e+00> : vector<1x16xf32>
    %2 = tpu.matmul %0, %1, %cst {dimension_numbers = #tpu.dot_dimension_numbers<[1], [1], [0], [0], [0, 0, 1, 0], [], []>} : vector<1x32xf32>, vector<16x32xf32>, vector<1x16xf32> -> vector<1x16xf32>
    %c0_3 = arith.constant 0 : index
    %3 = memref.load %arg3[%c0_3] : memref<1xf32, #tpu.memory_space<smem>>
    %4 = vector.broadcast %3 : f32 to vector<1x16xf32>
    %5 = arith.addf %2, %4 : vector<1x16xf32>
    %c0_4 = arith.constant 0 : index
    %c0_5 = arith.constant 0 : index
    %6 = vector.load %arg4[%c0_4, %c0_5] : memref<1x16xf32, #tpu.memory_space<vmem>>, vector<1x16xf32>
    tpu.vector_store %arg4[%c0_4, %c0_5], %5 {strides = array<i32>} : memref<1x16xf32, #tpu.memory_space<vmem>>, vector<1x16xf32>,
    return
  }
  func.func @transform_0(%arg0: i32) -> (i32, i32) {
    %c0_i32 = arith.constant 0 : i32
    %c0_i32_0 = arith.constant 0 : i32
    return %arg0, %c0_i32 : i32, i32
  }
  func.func @transform_1(%arg0: i32) -> (i32, i32) {
    %c0_i32 = arith.constant 0 : i32
    %c0_i32_0 = arith.constant 0 : i32
    %c0_i32_1 = arith.constant 0 : i32
    return %c0_i32, %c0_i32_0 : i32, i32
  }
  func.func @transform_2(%arg0: i32) -> i32 {
    %c0_i32 = arith.constant 0 : i32
    %c0_i32_0 = arith.constant 0 : i32
    return %c0_i32 : i32
  }
  func.func @transform_3(%arg0: i32) -> (i32, i32) {
    %c0_i32 = arith.constant 0 : i32
    %c0_i32_0 = arith.constant 0 : i32
    return %c0_i32, %arg0 : i32, i32
  }
}

</mosaic_0001>

<llo_original>
// kernel: value_head_forward.1
$region0: #{value_head_forward.1}
  #allocation0 [shape = 'u32[]', space=smem, size = 0x4, offset = 0x4, fixed_abs, tag = 'smem constant byte address 0x4 - core index']
  #allocation1 [shape = 'u32[144,128]{1,0:T(1,128)}', space=vmem, size = 0x12000, scoped, tag = 'internal scratch']
  #allocation2 [shape = 'f32[1]{0:T(128)S(6)}', space=smem, size = 0x200, scoped, tag = 'scoped memory for value_head_forward.1']
  %s0 = inlined_call_operand.hbm [shape: f32[16,32], index: 0, kind: input, shape index: {}]
  %s1 = inlined_call_operand.vmem [shape: f32[1,32], index: 1, kind: input, shape index: {}]
  %s2 = inlined_call_operand.<no memory space> [shape: f32[1], index: 2, kind: input, shape index: {}]
  %s3 = inlined_call_operand.vmem [shape: f32[1,16], index: 3, kind: output, shape index: {}]
  %s4 = sld [smem:[#allocation0]]
  $region26: #{value_head_forward.1} parent=0
    _
  %s6 = ssub.s32 1, %s4
  %s7 = scalar_select 0, %s6, %s4
  %8 = sst [smem:[#allocation2]] %s2
  $region1: #{value_head_forward.1} parent=0
    #allocation3 [shape = 'u8[8192]{0}', space=vmem, size = 0x2000, scoped, tag = 'input window, operand 0, single buffered']
    #allocation4 [shape = 's32[1]{0}', space=sflag, size = 0x4, scoped, tag = 'scoped memory for value_head_forward.1']
    %9 = vsyncpa [#allocation4], 0
    // Predicated region
    $region2: #{value_head_forward.1} parent=1 // pred_check
      _
    $region3: #{value_head_forward.1} parent=1 // pred_check_branch
      %11 = sbr.rel (0) target = $region5
    $region4: #{value_head_forward.1} parent=1 // pred_region
      %s13 = ssub.s32 256, 256
      %14 = vsyncadd [#allocation4], %s13
      %s15 = sshll.u32 [#allocation3], 4
      %s16 = int_to_ptr.vmem [resolvable:$true] %s15
      %21 = dma.hbm_to_vmem [thread:$0]  %s0, 256, %s16, [#allocation4], 128, 128, 8
    $region5: #{value_head_forward.1} parent=1 // pred_fallthru
      _
    // Predicated region
    $region6: #{value_head_forward.1} parent=1 // pred_check
      _
    $region7: #{value_head_forward.1} parent=1 // pred_check_branch
      %23 = sbr.rel (0) target = $region9
    $region8: #{value_head_forward.1} parent=1 // pred_region
      _
    $region9: #{value_head_forward.1} parent=1 // pred_fallthru
      _
    // Predicated region
    $region10: #{value_head_forward.1} parent=1 // pred_check
      _
    $region11: #{value_head_forward.1} parent=1 // pred_check_branch
      %25 = sbr.rel (0) target = $region13
    $region12: #{value_head_forward.1} parent=1 // pred_region
      _
    $region13: #{value_head_forward.1} parent=1 // pred_fallthru
      _
    // Predicated region
    $region14: #{value_head_forward.1} parent=1 // pred_check
      _
    $region15: #{value_head_forward.1} parent=1 // pred_check_branch
      %27 = sbr.rel (0) target = $region17
    $region16: #{value_head_forward.1} parent=1 // pred_region
      %28 = dma.done [#allocation4], 256
    $region17: #{value_head_forward.1} parent=1 // pred_fallthru
      _
    %v29 = vld [vmem:[%s1] sm:$0x1]
    %v30 = vld [vmem:[#allocation3] sm:$0xff]
    %v31 = vld [vmem:[#allocation3 + $0x8] sm:$0xff]
    %s32 = sld [smem:[#allocation2]]
    %v33 = vstv %s32
    %vm34 = vcmask 261120
    %v36 = vsel %vm34, %v29, 0
    %v39 = vsel %vm34, %v30, 0
    %v42 = vsel %vm34, %v31, 0
    %44 = vmatprep.subr.mxu0 0.0
    %45 = vmatpush1.xpose.msra.mxu0 0.0
    %46 = vmatprep.subr.mxu0 0.0
    %47 = vmatpush1.xpose.msra.mxu0 0.0
    %48 = vmatprep.subr.mxu0 0.0
    %49 = vmatpush1.xpose.msra.mxu0 0.0
    %50 = vmatprep.subr.mxu0 0.0
    %51 = vmatpush1.xpose.msra.mxu0 0.0
    %52 = vmatprep.subr.mxu0 0.0
    %53 = vmatpush1.xpose.msra.mxu0 0.0
    %54 = vmatprep.subr.mxu0 0.0
    %55 = vmatpush1.xpose.msra.mxu0 0.0
    %56 = vmatprep.subr.mxu0 0.0
    %57 = vmatpush1.xpose.msra.mxu0 0.0
    %58 = vmatprep.subr.mxu0 0.0
    %59 = vmatpush1.xpose.msra.mxu0 0.0
    %60 = vmatprep.subr.mxu0 0.0
    %61 = vmatpush1.xpose.msra.mxu0 0.0
    %62 = vmatprep.subr.mxu0 0.0
    %63 = vmatpush1.xpose.msra.mxu0 0.0
    %64 = vmatprep.subr.mxu0 0.0
    %65 = vmatpush1.xpose.msra.mxu0 0.0
    %66 = vmatprep.subr.mxu0 0.0
    %67 = vmatpush1.xpose.msra.mxu0 0.0
    %68 = vmatprep.subr.mxu0 0.0
    %69 = vmatpush1.xpose.msra.mxu0 0.0
    %70 = vmatprep.subr.mxu0 0.0
    %71 = vmatpush1.xpose.msra.mxu0 0.0
    %72 = vmatprep.subr.mxu0 0.0
    %73 = vmatpush1.xpose.msra.mxu0 %v42
    %74 = vmatprep.subr.mxu0 0.0
    %75 = vmatpush1.xpose.msra.mxu0 %v39
    %76 = vmatprep.subr.mxu0 0.0
    %77 = vmatpush2.xpose.msra.mxu0 0.0
    %78 = vmatprep.subr.mxu0 0.0
    %79 = vmatpush2.xpose.msra.mxu0 0.0
    %80 = vmatprep.subr.mxu0 0.0
    %81 = vmatpush2.xpose.msra.mxu0 0.0
    %82 = vmatprep.subr.mxu0 0.0
    %83 = vmatpush2.xpose.msra.mxu0 0.0
    %84 = vmatprep.subr.mxu0 0.0
    %85 = vmatpush2.xpose.msra.mxu0 0.0
    %86 = vmatprep.subr.mxu0 0.0
    %87 = vmatpush2.xpose.msra.mxu0 0.0
    %88 = vmatprep.subr.mxu0 0.0
    %89 = vmatpush2.xpose.msra.mxu0 0.0
    %90 = vmatprep.subr.mxu0 0.0
    %91 = vmatpush2.xpose.msra.mxu0 0.0
    %92 = vmatprep.subr.mxu0 0.0
    %93 = vmatpush2.xpose.msra.mxu0 0.0
    %94 = vmatprep.subr.mxu0 0.0
    %95 = vmatpush2.xpose.msra.mxu0 0.0
    %96 = vmatprep.subr.mxu0 0.0
    %97 = vmatpush2.xpose.msra.mxu0 0.0
    %98 = vmatprep.subr.mxu0 0.0
    %99 = vmatpush2.xpose.msra.mxu0 0.0
    %100 = vmatprep.subr.mxu0 0.0
    %101 = vmatpush2.xpose.msra.mxu0 0.0
    %102 = vmatprep.subr.mxu0 0.0
    %103 = vmatpush2.xpose.msra.mxu0 0.0
    %104 = vmatprep.subr.mxu0 0.0
    %105 = vmatpush2.xpose.msra.mxu0 0.0
    %106 = vmatprep.subr.mxu0 0.0
    %107 = vmatpush2.xpose.msra.mxu0 0.0
    %108 = vmatprep.mubr.f32.mxu0 0.0
    %109 = vmatmul.mubr.f32.gmra.mxu0 %v36
    %v110 = vpop.f32.mrf.mxu0
    %v111 = vadd.f32 %v33, %v110
    %v112 = vpop.f32.mrf.mxu0
    %113 = vdwg.mxu0
    %vm114 = vcmask 122880
    %115 = vst.msk [vmem:[%s3] sm:$0x1] %vm114, %v111
    // Predicated region
    $region18: #{value_head_forward.1} parent=1 // pred_check
      _
    $region19: #{value_head_forward.1} parent=1 // pred_check_branch
      %117 = sbr.rel (0) target = $region21
    $region20: #{value_head_forward.1} parent=1 // pred_region
      _
    $region21: #{value_head_forward.1} parent=1 // pred_fallthru
      _
    // Predicated region
    $region22: #{value_head_forward.1} parent=1 // pred_check
      _
    $region23: #{value_head_forward.1} parent=1 // pred_check_branch
      %119 = sbr.rel (0) target = $region25
    $region24: #{value_head_forward.1} parent=1 // pred_region
      _
    $region25: #{value_head_forward.1} parent=1 // pred_fallthru
      _
    %120 = vsyncpa [#allocation4], 1

</llo_original>
